<compile_context>
chip_gen: v6e
topology: v6e:2x2x1
jax: 0.10.0
libtpu: 0.0.40
codegen_flags: <defaults>
</compile_context>

<pallas_src>
import functools
import math

import jax
import jax.numpy as jnp
from jax import lax
from jax.experimental import pallas as pl
from jax.experimental.pallas import tpu as pltpu


# ---------------------------------------------------------------------------
# Helpers
# ---------------------------------------------------------------------------

_WEIGHT_PM_PROBED = False
_WEIGHT_PM = None


def _weight_pipeline_mode():
    """Return pl.Buffered(1) if this JAX build supports single-buffering
    constant-index blocks via BlockSpec(pipeline_mode=...), else None."""
    global _WEIGHT_PM_PROBED, _WEIGHT_PM
    if _WEIGHT_PM_PROBED:
        return _WEIGHT_PM
    _WEIGHT_PM_PROBED = True
    _WEIGHT_PM = None
    try:
        pm = pl.Buffered(1)

        def _copy(x_ref, o_ref):
            o_ref[...] = x_ref[...]

        fn = pl.pallas_call(
            _copy,
            out_shape=jax.ShapeDtypeStruct((16, 128), jnp.float32),
            grid_spec=pltpu.PrefetchScalarGridSpec(
                num_scalar_prefetch=0,
                grid=(2,),
                in_specs=[pl.BlockSpec((8, 128), lambda i: (0, 0),
                                       pipeline_mode=pm)],
                out_specs=pl.BlockSpec((8, 128), lambda i: (i, 0)),
            ),
        )
        probe_x = jnp.arange(8 * 128, dtype=jnp.float32).reshape(8, 128)
        probe_y = jax.block_until_ready(fn(probe_x))
        if bool(jnp.allclose(probe_y[:8], probe_x)) and bool(
                jnp.allclose(probe_y[8:], probe_x)):
            _WEIGHT_PM = pm
    except Exception:
        _WEIGHT_PM = None
    return _WEIGHT_PM


def _const_spec(shape, pipeline_mode):
    """BlockSpec for an operand whose block index never changes on the grid."""
    zeros = (0,) * len(shape)
    if pipeline_mode is None:
        return pl.BlockSpec(shape, lambda *_: zeros)
    return pl.BlockSpec(shape, lambda *_: zeros, pipeline_mode=pipeline_mode)


def _pick_row_block(rows: int, max_rows: int = 512) -> int:
    """Largest divisor of `rows` that is sublane-aligned (%8 == 0),
    <= max_rows and leaves >= 2 grid steps (so both v7x TensorCores get
    work).  Falls back to a single full-extent block for tiny/odd sizes."""
    for tm in range(min(rows, max_rows), 0, -1):
        if rows % tm:
            continue
        if tm % 8:
            continue
        if rows // tm < 2:
            continue
        return tm
    return rows


def _vmem_limit(nbytes: int) -> int:
    """Scoped-VMEM limit derived from the computed footprint (+30% headroom),
    clamped to [32 MiB, 64 MiB] so it is valid on v5e/v6e (128 MiB physical)
    and v7x (64 MiB physical) alike."""
    return int(min(64 * 2 ** 20,
                   max(32 * 2 ** 20, int(nbytes * 1.3) + (2 << 20))))


# ---------------------------------------------------------------------------
# Kernels
# ---------------------------------------------------------------------------

def _qkv_proj_kernel(x_ref, wq_ref, bq_ref, wk_ref, bk_ref, wv_ref, bv_ref,
                     q_ref, k_ref, v_ref, *, inv_scale: float):
    """Fused q/k/v projection over one row block: full K=H MXU matmuls, bf16
    operands / f32 accumulation, 1/sqrt(head_dim) folded into q."""
    xb = x_ref[...]                                            # (TM, H) bf16
    q = jnp.dot(xb, wq_ref[...], preferred_element_type=jnp.float32) + bq_ref[...]
    q_ref[...] = (q * inv_scale).astype(q_ref.dtype)
    k = jnp.dot(xb, wk_ref[...], preferred_element_type=jnp.float32) + bk_ref[...]
    k_ref[...] = k.astype(k_ref.dtype)
    v = jnp.dot(xb, wv_ref[...], preferred_element_type=jnp.float32) + bv_ref[...]
    v_ref[...] = v.astype(v_ref.dtype)


def _sdpa_kernel(q_ref, k_ref, v_ref, o_ref, *, mask_type: str, seq_len: int):
    """One (batch, head) grid step of masked SDPA: fp32 scores + softmax,
    bf16 MXU operands.  q is pre-scaled by 1/sqrt(head_dim)."""
    S = seq_len
    q = q_ref[0, 0]                                            # (S, D) bf16
    k = k_ref[0, 0]
    v = v_ref[0, 0]

    s = lax.dot_general(q, k, (((1,), (1,)), ((), ())),
                        preferred_element_type=jnp.float32)    # (S, S) q @ k^T

    row = lax.broadcasted_iota(jnp.int32, (S, S), 0)
    col = lax.broadcasted_iota(jnp.int32, (S, S), 1)
    if mask_type == "triu":
        bias = jnp.where(col > row, -jnp.inf, 0.0)
    elif mask_type == "negative_fill":
        bias = jnp.where(col > row, -65504.0, 0.0)
    elif mask_type == "non_causal":
        bias = jnp.where(col % 2 == 1, -jnp.inf, 0.0)
    else:
        raise ValueError(f"Unknown mask_type: {mask_type}")
    # Additive mask bias, matching the PyTorch module (0 / fill added to scores).
    s = s + bias.astype(jnp.float32)

    m = jnp.max(s, axis=-1, keepdims=True)
    e = jnp.exp(s - m)
    # NOTE: approx reciprocal runs on the EUP slot; ~1e-3 rel error vs exact.
    p = e * pl.reciprocal(jnp.sum(e, axis=-1, keepdims=True), approx=True)
    # TODO(synk): dropout_p=0.0 is identity; nonzero dropout would need
    # pltpu.prng_seed + pltpu.stateful_bernoulli here.
    o = jnp.dot(p.astype(jnp.bfloat16), v, preferred_element_type=jnp.float32)
    o_ref[0, 0] = o.astype(o_ref.dtype)


def _out_proj_kernel(x_ref, w_ref, b_ref, o_ref):
    """Output projection: one (TM,H)@(H,h_pad) matmul (full K=H depth) with
    lane-dense (h_pad % 128 == 0) fp32 stores."""
    acc = jnp.dot(x_ref[...], w_ref[...], preferred_element_type=jnp.float32)
    o_ref[...] = (acc + b_ref[...]).astype(o_ref.dtype)


# ---------------------------------------------------------------------------
# Wrapper
# ---------------------------------------------------------------------------

def causal_attention(x, params, *, num_heads: int, num_kv_heads=None,
                     mask_type: str = "triu"):
    """x: (B, S, H) float32.  params: dict of transposed weights / biases."""
    B, S, H = x.shape
    nh = num_heads
    nkv = num_kv_heads if num_kv_heads is not None else nh
    assert H % nh == 0 and nh % nkv == 0
    D = H // nh
    h_kv = nkv * D
    n_rep = nh // nkv
    inv_scale = 1.0 / math.sqrt(D)
    R = B * S
    h_pad = -(-H // 128) * 128          # lane-dense output-projection columns

    pm = _weight_pipeline_mode()        # single-buffer constant weight blocks
    wbuf = 1 if pm is not None else 2

    # Weights cast to bf16 once host-side (MXU-native, half DMA); biases fp32.
    wq = params["wq_t"].astype(jnp.bfloat16)                   # (H, H)
    wk = params["wk_t"].astype(jnp.bfloat16)                   # (H, h_kv)
    wv = params["wv_t"].astype(jnp.bfloat16)                   # (H, h_kv)
    bq = params["bq"].astype(jnp.float32)                      # (1, H)
    bk = params["bk"].astype(jnp.float32)                      # (1, h_kv)
    bv = params["bv"].astype(jnp.float32)                      # (1, h_kv)
    wo = jnp.pad(params["wo_t"], ((0, 0), (0, h_pad - H))).astype(jnp.bfloat16)
    bo = jnp.pad(params["bo"], ((0, 0), (0, h_pad - H))).astype(jnp.float32)

    # bf16 activation stream: halves the dominant HBM->VMEM DMA.
    x_flat = x.reshape(R, H).astype(jnp.bfloat16)

    TM = _pick_row_block(R)

    # ---- kernel 1: fused q/k/v projection ---------------------------------
    vmem_a = _vmem_limit(
        2 * TM * H * 2
        + 2 * TM * (H + 2 * h_kv) * 2
        + wbuf * ((H * H + 2 * H * h_kv) * 2 + (H + 2 * h_kv) * 4))
    q, k, v = pl.pallas_call(
        functools.partial(_qkv_proj_kernel, inv_scale=inv_scale),
        out_shape=(jax.ShapeDtypeStruct((R, H), jnp.bfloat16),
                   jax.ShapeDtypeStruct((R, h_kv), jnp.bfloat16),
                   jax.ShapeDtypeStruct((R, h_kv), jnp.bfloat16)),
        grid_spec=pltpu.PrefetchScalarGridSpec(
            num_scalar_prefetch=0,
            grid=(R // TM,),
            in_specs=[
                pl.BlockSpec((TM, H), lambda i: (i, 0)),        # x
                _const_spec((H, H), pm),                        # wq
                _const_spec((1, H), pm),                        # bq
                _const_spec((H, h_kv), pm),                     # wk
                _const_spec((1, h_kv), pm),                     # bk
                _const_spec((H, h_kv), pm),                     # wv
                _const_spec((1, h_kv), pm),                     # bv
            ],
            out_specs=[
                pl.BlockSpec((TM, H), lambda i: (i, 0)),
                pl.BlockSpec((TM, h_kv), lambda i: (i, 0)),
                pl.BlockSpec((TM, h_kv), lambda i: (i, 0)),
            ],
        ),
        compiler_params=pltpu.CompilerParams(
            dimension_semantics=("parallel",),
            vmem_limit_bytes=vmem_a),
    )(x_flat, wq, bq, wk, bk, wv, bv)

    # Head-major layout for the attention kernel: head index becomes a leading
    # BlockSpec-indexed axis, so the kernel needs no dynamic lane slicing and
    # no in-kernel relayouts (the relayout happens once, between kernels).
    qh = q.reshape(B, S, nh, D).transpose(0, 2, 1, 3)           # (B, nh, S, D)
    kh = k.reshape(B, S, nkv, D).transpose(0, 2, 1, 3)          # (B, nkv, S, D)
    vh = v.reshape(B, S, nkv, D).transpose(0, 2, 1, 3)

    # ---- kernel 2: per-(batch, head) SDPA ----------------------------------
    # TODO(synk): flash-tile (kv-block grid axis + online-softmax scratch,
    #             causal block skipping) for S >~ 512.
    vmem_b = _vmem_limit(2 * 4 * S * D * 2 + 2 * S * S * 4)
    attn = pl.pallas_call(
        functools.partial(_sdpa_kernel, mask_type=mask_type, seq_len=S),
        out_shape=jax.ShapeDtypeStruct((B, nh, S, D), jnp.bfloat16),
        grid_spec=pltpu.PrefetchScalarGridSpec(
            num_scalar_prefetch=0,
            grid=(B, nh),
            in_specs=[
                pl.BlockSpec((1, 1, S, D), lambda b, h: (b, h, 0, 0)),
                pl.BlockSpec((1, 1, S, D), lambda b, h: (b, h // n_rep, 0, 0)),
                pl.BlockSpec((1, 1, S, D), lambda b, h: (b, h // n_rep, 0, 0)),
            ],
            out_specs=pl.BlockSpec((1, 1, S, D), lambda b, h: (b, h, 0, 0)),
        ),
        compiler_params=pltpu.CompilerParams(
            dimension_semantics=("parallel", "parallel"),
            vmem_limit_bytes=vmem_b),
    )(qh, kh, vh)

    # ---- kernel 3: output projection (one K=H matmul) -----------------------
    attn_flat = attn.transpose(0, 2, 1, 3).reshape(R, H)        # (R, H) bf16
    vmem_c = _vmem_limit(
        2 * TM * H * 2 + 2 * TM * h_pad * 4
        + wbuf * (H * h_pad * 2 + h_pad * 4))
    out = pl.pallas_call(
        _out_proj_kernel,
        out_shape=jax.ShapeDtypeStruct((R, h_pad), x.dtype),
        grid_spec=pltpu.PrefetchScalarGridSpec(
            num_scalar_prefetch=0,
            grid=(R // TM,),
            in_specs=[
                pl.BlockSpec((TM, H), lambda i: (i, 0)),        # attn
                _const_spec((H, h_pad), pm),                    # wo
                _const_spec((1, h_pad), pm),                    # bo
            ],
            out_specs=pl.BlockSpec((TM, h_pad), lambda i: (i, 0)),
        ),
        compiler_params=pltpu.CompilerParams(
            dimension_semantics=("parallel",),
            vmem_limit_bytes=vmem_c),
    )(attn_flat, wo, bo)

    return out[:, :H].reshape(B, S, H)


# ---------------------------------------------------------------------------
# Pure-JAX reference (mirrors the PyTorch forward pass) and test harness
# ---------------------------------------------------------------------------

def _reference(x, params, *, num_heads: int, num_kv_heads=None,
               mask_type: str = "triu"):
    B, S, H = x.shape
    nkv = num_kv_heads if num_kv_heads is not None else num_heads
    D = H // num_heads

    def lin(t, w_t, b):
        return t @ w_t + b[0]

    q = lin(x, params["wq_t"], params["bq"]).reshape(B, S, num_heads, D)
    k = lin(x, params["wk_t"], params["bk"]).reshape(B, S, nkv, D)
    v = lin(x, params["wv_t"], params["bv"]).reshape(B, S, nkv, D)
    q = q.transpose(0, 2, 1, 3)
    k = k.transpose(0, 2, 1, 3)
    v = v.transpose(0, 2, 1, 3)
    if nkv != num_heads:
        rep = num_heads // nkv
        k = jnp.repeat(k, rep, axis=1)
        v = jnp.repeat(v, rep, axis=1)

    attn = jnp.einsum("bhqd,bhkd->bhqk", q, k) / (float(D) ** 0.5)
    row = jnp.arange(S)[:, None]
    col = jnp.arange(S)[None, :]
    if mask_type == "triu":
        bias = jnp.where(col > row, -jnp.inf, 0.0)
    elif mask_type == "negative_fill":
        bias = jnp.where(col > row, -65504.0, 0.0)
    elif mask_type == "non_causal":
        bias = jnp.where(col % 2 == 1, -jnp.inf, 0.0)
    else:
        raise ValueError(mask_type)
    attn = attn + bias[None, None].astype(x.dtype)
    attn = jax.nn.softmax(attn.astype(jnp.float32), axis=-1).astype(x.dtype)
    out = jnp.einsum("bhqk,bhkd->bhqd", attn, v)
    out = out.transpose(0, 2, 1, 3).reshape(B, S, H)
    return lin(out, params["wo_t"], params["bo"])


def _init_params(key, hidden_size, kv_size=None):
    """Deterministic Linear-layer params (PyTorch (out,in) weights, transposed)."""
    kv_size = kv_size if kv_size is not None else hidden_size
    ks = jax.random.split(key, 8)
    bound = 1.0 / (hidden_size ** 0.5)

    def u(k, shape):
        return jax.random.uniform(k, shape, jnp.float32, -bound, bound)

    return {
        "wq_t": u(ks[0], (hidden_size, hidden_size)), "bq": u(ks[1], (1, hidden_size)),
        "wk_t": u(ks[2], (hidden_size, kv_size)),     "bk": u(ks[3], (1, kv_size)),
        "wv_t": u(ks[4], (hidden_size, kv_size)),     "bv": u(ks[5], (1, kv_size)),
        "wo_t": u(ks[6], (hidden_size, hidden_size)), "bo": u(ks[7], (1, hidden_size)),
    }


if __name__ == "__main__":
    hidden_size = 32
    num_heads = 4
    batch_size = 2
    seq_len = 8
    head_dim = hidden_size // num_heads

    key = jax.random.PRNGKey(0)
    k_x, k_p, k_p2 = jax.random.split(key, 3)
    x = jax.random.normal(k_x, (batch_size, seq_len, hidden_size), jnp.float32)

    configs = [
        ("triu", num_heads, k_p),            # default causal mask
        ("negative_fill", num_heads, k_p),   # -65504 fill variant
        ("non_causal", num_heads, k_p),      # odd-column mask variant
        ("triu", 2, k_p2),                   # GQA: num_kv_heads=2 (repeat_kv)
    ]
    for mask_type, nkv, kp in configs:
        params = _init_params(kp, hidden_size, kv_size=nkv * head_dim)
        out = causal_attention(x, params, num_heads=num_heads,
                               num_kv_heads=nkv, mask_type=mask_type)
        out = jax.block_until_ready(out)
        ref = _reference(x, params, num_heads=num_heads, num_kv_heads=nkv,
                         mask_type=mask_type)
        assert out.shape == (batch_size, seq_len, hidden_size)
        # bf16 MXU operands / bf16-staged activations vs fp32 reference.
        assert jnp.allclose(out, ref, atol=5e-2, rtol=5e-2), (
            f"mismatch vs reference for mask_type={mask_type}, nkv={nkv}")

    print("KERNEL_OK")
</pallas_src>

<mosaic_0001>
module attributes {stable_mosaic.version = 11 : i64} {
  func.func @_copy(%arg0: i32, %arg1: memref<8x128xf32, #tpu.memory_space<vmem>>, %arg2: memref<8x128xf32, #tpu.memory_space<vmem>>) attributes {dimension_semantics = [#tpu.dimension_semantics<arbitrary>], iteration_bounds = array<i64: 2>, scalar_prefetch = 0 : i64, scratch_operands = 0 : i64, tpu.core_type = #tpu.core_type<tc>, window_params = [{pipeline_mode = #tpu.pipeline_mode<synchronous>, transform_indices = @transform_0, window_bounds = array<i64: 8, 128>}, {transform_indices = @transform_1, window_bounds = array<i64: 8, 128>}]} {
    %c0 = arith.constant 0 : index
    %c0_0 = arith.constant 0 : index
    %0 = vector.load %arg1[%c0, %c0_0] : memref<8x128xf32, #tpu.memory_space<vmem>>, vector<8x128xf32>
    %c0_1 = arith.constant 0 : index
    %c0_2 = arith.constant 0 : index
    %1 = vector.load %arg2[%c0_1, %c0_2] : memref<8x128xf32, #tpu.memory_space<vmem>>, vector<8x128xf32>
    tpu.vector_store %arg2[%c0_1, %c0_2], %0 {strides = array<i32>} : memref<8x128xf32, #tpu.memory_space<vmem>>, vector<8x128xf32>,
    return
  }
  func.func @transform_0(%arg0: i32) -> (i32, i32) {
    %c0_i32 = arith.constant 0 : i32
    %c0_i32_0 = arith.constant 0 : i32
    %c0_i32_1 = arith.constant 0 : i32
    return %c0_i32, %c0_i32_0 : i32, i32
  }
  func.func @transform_1(%arg0: i32) -> (i32, i32) {
    %c0_i32 = arith.constant 0 : i32
    %c0_i32_0 = arith.constant 0 : i32
    return %arg0, %c0_i32 : i32, i32
  }
}

module attributes {stable_mosaic.version = 11 : i64} {
  func.func @_qkv_proj_kernel(%arg0: i32, %arg1: memref<8x32xbf16, #tpu.memory_space<vmem>>, %arg2: memref<32x32xbf16, #tpu.memory_space<vmem>>, %arg3: memref<1x32xf32, #tpu.memory_space<vmem>>, %arg4: memref<32x32xbf16, #tpu.memory_space<vmem>>, %arg5: memref<1x32xf32, #tpu.memory_space<vmem>>, %arg6: memref<32x32xbf16, #tpu.memory_space<vmem>>, %arg7: memref<1x32xf32, #tpu.memory_space<vmem>>, %arg8: memref<8x32xbf16, #tpu.memory_space<vmem>>, %arg9: memref<8x32xbf16, #tpu.memory_space<vmem>>, %arg10: memref<8x32xbf16, #tpu.memory_space<vmem>>) attributes {dimension_semantics = [#tpu.dimension_semantics<parallel>], iteration_bounds = array<i64: 2>, scalar_prefetch = 0 : i64, scratch_operands = 0 : i64, tpu.core_type = #tpu.core_type<tc>, window_params = [{transform_indices = @transform_0, window_bounds = array<i64: 8, 32>}, {pipeline_mode = #tpu.pipeline_mode<synchronous>, transform_indices = @transform_1, window_bounds = array<i64: 32, 32>}, {pipeline_mode = #tpu.pipeline_mode<synchronous>, transform_indices = @transform_2, window_bounds = array<i64: 1, 32>}, {pipeline_mode = #tpu.pipeline_mode<synchronous>, transform_indices = @transform_3, window_bounds = array<i64: 32, 32>}, {pipeline_mode = #tpu.pipeline_mode<synchronous>, transform_indices = @transform_4, window_bounds = array<i64: 1, 32>}, {pipeline_mode = #tpu.pipeline_mode<synchronous>, transform_indices = @transform_5, window_bounds = array<i64: 32, 32>}, {pipeline_mode = #tpu.pipeline_mode<synchronous>, transform_indices = @transform_6, window_bounds = array<i64: 1, 32>}, {transform_indices = @transform_7, window_bounds = array<i64: 8, 32>}, {transform_indices = @transform_8, window_bounds = array<i64: 8, 32>}, {transform_indices = @transform_9, window_bounds = array<i64: 8, 32>}]} {
    %c0 = arith.constant 0 : index
    %c0_0 = arith.constant 0 : index
    %0 = vector.load %arg1[%c0, %c0_0] : memref<8x32xbf16, #tpu.memory_space<vmem>>, vector<8x32xbf16>
    %c0_1 = arith.constant 0 : index
    %c0_2 = arith.constant 0 : index
    %1 = vector.load %arg2[%c0_1, %c0_2] : memref<32x32xbf16, #tpu.memory_space<vmem>>, vector<32x32xbf16>
    %cst = arith.constant dense<0.000000e+00> : vector<8x32xf32>
    %2 = tpu.matmul %0, %1, %cst {dimension_numbers = #tpu.dot_dimension_numbers<[1], [0], [0], [1], [0, 0, 1, 1], [], []>} : vector<8x32xbf16>, vector<32x32xbf16>, vector<8x32xf32> -> vector<8x32xf32>
    %c0_3 = arith.constant 0 : index
    %c0_4 = arith.constant 0 : index
    %3 = vector.load %arg3[%c0_3, %c0_4] : memref<1x32xf32, #tpu.memory_space<vmem>>, vector<1x32xf32>
    %4 = vector.broadcast %3 : vector<1x32xf32> to vector<8x32xf32>
    %5 = arith.addf %2, %4 : vector<8x32xf32>
    %cst_5 = arith.constant 0.353553385 : f32
    %6 = vector.broadcast %cst_5 : f32 to vector<8x32xf32>
    %7 = arith.mulf %5, %6 : vector<8x32xf32>
    %8 = arith.truncf %7 : vector<8x32xf32> to vector<8x32xbf16>
    %c0_6 = arith.constant 0 : index
    %c0_7 = arith.constant 0 : index
    %9 = vector.load %arg8[%c0_6, %c0_7] : memref<8x32xbf16, #tpu.memory_space<vmem>>, vector<8x32xbf16>
    tpu.vector_store %arg8[%c0_6, %c0_7], %8 {strides = array<i32>} : memref<8x32xbf16, #tpu.memory_space<vmem>>, vector<8x32xbf16>,
    %c0_8 = arith.constant 0 : index
    %c0_9 = arith.constant 0 : index
    %10 = vector.load %arg4[%c0_8, %c0_9] : memref<32x32xbf16, #tpu.memory_space<vmem>>, vector<32x32xbf16>
    %cst_10 = arith.constant dense<0.000000e+00> : vector<8x32xf32>
    %11 = tpu.matmul %0, %10, %cst_10 {dimension_numbers = #tpu.dot_dimension_numbers<[1], [0], [0], [1], [0, 0, 1, 1], [], []>} : vector<8x32xbf16>, vector<32x32xbf16>, vector<8x32xf32> -> vector<8x32xf32>
    %c0_11 = arith.constant 0 : index
    %c0_12 = arith.constant 0 : index
    %12 = vector.load %arg5[%c0_11, %c0_12] : memref<1x32xf32, #tpu.memory_space<vmem>>, vector<1x32xf32>
    %13 = vector.broadcast %12 : vector<1x32xf32> to vector<8x32xf32>
    %14 = arith.addf %11, %13 : vector<8x32xf32>
    %15 = arith.truncf %14 : vector<8x32xf32> to vector<8x32xbf16>
    %c0_13 = arith.constant 0 : index
    %c0_14 = arith.constant 0 : index
    %16 = vector.load %arg9[%c0_13, %c0_14] : memref<8x32xbf16, #tpu.memory_space<vmem>>, vector<8x32xbf16>
    tpu.vector_store %arg9[%c0_13, %c0_14], %15 {strides = array<i32>} : memref<8x32xbf16, #tpu.memory_space<vmem>>, vector<8x32xbf16>,
    %c0_15 = arith.constant 0 : index
    %c0_16 = arith.constant 0 : index
    %17 = vector.load %arg6[%c0_15, %c0_16] : memref<32x32xbf16, #tpu.memory_space<vmem>>, vector<32x32xbf16>
    %cst_17 = arith.constant dense<0.000000e+00> : vector<8x32xf32>
    %18 = tpu.matmul %0, %17, %cst_17 {dimension_numbers = #tpu.dot_dimension_numbers<[1], [0], [0], [1], [0, 0, 1, 1], [], []>} : vector<8x32xbf16>, vector<32x32xbf16>, vector<8x32xf32> -> vector<8x32xf32>
    %c0_18 = arith.constant 0 : index
    %c0_19 = arith.constant 0 : index
    %19 = vector.load %arg7[%c0_18, %c0_19] : memref<1x32xf32, #tpu.memory_space<vmem>>, vector<1x32xf32>
    %20 = vector.broadcast %19 : vector<1x32xf32> to vector<8x32xf32>
    %21 = arith.addf %18, %20 : vector<8x32xf32>
    %22 = arith.truncf %21 : vector<8x32xf32> to vector<8x32xbf16>
    %c0_20 = arith.constant 0 : index
    %c0_21 = arith.constant 0 : index
    %23 = vector.load %arg10[%c0_20, %c0_21] : memref<8x32xbf16, #tpu.memory_space<vmem>>, vector<8x32xbf16>
    tpu.vector_store %arg10[%c0_20, %c0_21], %22 {strides = array<i32>} : memref<8x32xbf16, #tpu.memory_space<vmem>>, vector<8x32xbf16>,
    return
  }
  func.func @transform_0(%arg0: i32) -> (i32, i32) {
    %c0_i32 = arith.constant 0 : i32
    %c0_i32_0 = arith.constant 0 : i32
    return %arg0, %c0_i32 : i32, i32
  }
  func.func @transform_1(%arg0: i32) -> (i32, i32) {
    %c0_i32 = arith.constant 0 : i32
    %c0_i32_0 = arith.constant 0 : i32
    %c0_i32_1 = arith.constant 0 : i32
    return %c0_i32, %c0_i32_0 : i32, i32
  }
  func.func @transform_2(%arg0: i32) -> (i32, i32) {
    %c0_i32 = arith.constant 0 : i32
    %c0_i32_0 = arith.constant 0 : i32
    %c0_i32_1 = arith.constant 0 : i32
    return %c0_i32, %c0_i32_0 : i32, i32
  }
  func.func @transform_3(%arg0: i32) -> (i32, i32) {
    %c0_i32 = arith.constant 0 : i32
    %c0_i32_0 = arith.constant 0 : i32
    %c0_i32_1 = arith.constant 0 : i32
    return %c0_i32, %c0_i32_0 : i32, i32
  }
  func.func @transform_4(%arg0: i32) -> (i32, i32) {
    %c0_i32 = arith.constant 0 : i32
    %c0_i32_0 = arith.constant 0 : i32
    %c0_i32_1 = arith.constant 0 : i32
    return %c0_i32, %c0_i32_0 : i32, i32
  }
  func.func @transform_5(%arg0: i32) -> (i32, i32) {
    %c0_i32 = arith.constant 0 : i32
    %c0_i32_0 = arith.constant 0 : i32
    %c0_i32_1 = arith.constant 0 : i32
    return %c0_i32, %c0_i32_0 : i32, i32
  }
  func.func @transform_6(%arg0: i32) -> (i32, i32) {
    %c0_i32 = arith.constant 0 : i32
    %c0_i32_0 = arith.constant 0 : i32
    %c0_i32_1 = arith.constant 0 : i32
    return %c0_i32, %c0_i32_0 : i32, i32
  }
  func.func @transform_7(%arg0: i32) -> (i32, i32) {
    %c0_i32 = arith.constant 0 : i32
    %c0_i32_0 = arith.constant 0 : i32
    return %arg0, %c0_i32 : i32, i32
  }
  func.func @transform_8(%arg0: i32) -> (i32, i32) {
    %c0_i32 = arith.constant 0 : i32
    %c0_i32_0 = arith.constant 0 : i32
    return %arg0, %c0_i32 : i32, i32
  }
  func.func @transform_9(%arg0: i32) -> (i32, i32) {
    %c0_i32 = arith.constant 0 : i32
    %c0_i32_0 = arith.constant 0 : i32
    return %arg0, %c0_i32 : i32, i32
  }
}

</mosaic_0001>

<llo_original>
// kernel: tpu_custom_call.1
$region0: #{tpu_custom_call.1}
  #allocation0 [shape = 'u32[]', space=smem, size = 0x4, offset = 0x4, fixed_abs, tag = 'smem constant byte address 0x4 - core index']
  #allocation1 [shape = 'u32[144,128]{1,0:T(1,128)}', space=vmem, size = 0x12000, scoped, tag = 'internal scratch']
  %s0 = inlined_call_operand.hbm [shape: f32[8,128], index: 0, kind: input, shape index: {}]
  %s1 = inlined_call_operand.hbm [shape: f32[16,128], index: 1, kind: output, shape index: {}]
  %s2 = sld [smem:[#allocation0]]
  $region41: #{tpu_custom_call.1} parent=0
    _
  %s4 = ssub.s32 1, %s2
  %s5 = scalar_select 0, %s4, %s2
  $region1: #{tpu_custom_call.1} parent=0
    #allocation2 [shape = 'u8[4096]{0}', space=vmem, size = 0x1000, scoped, tag = 'input window, operand 0, single buffered']
    #allocation3 [shape = 's32[2]{0}', space=sflag, size = 0x8, scoped, tag = 'scoped memory for tpu_custom_call.1']
    #allocation4 [shape = 's32[2]{0}', space=sflag, size = 0x8, scoped, tag = 'scoped memory for tpu_custom_call.1']
    #allocation5 [shape = 'u8[8192]{0}', space=vmem, size = 0x2000, scoped, tag = 'output window, operand 0']
    %6 = vsyncpa [#allocation3], 0
    %7 = vsyncpa [#allocation4], 0
    %s8 = scalar_lea.sflag [#allocation4], 1
    %9 = vsyncpa %s8, 0
    loop: start=0, step=1, limit=4
    $region2: #{tpu_custom_call.1} parent=1 // loop_pre_header
      _
    $region3: #{tpu_custom_call.1} parent=1 // loop_header
      %s11 = sphi 0, %s15
      %p12 = scmp.ge.s32.totalorder %s11, 4
      %s19 = sphi 0, %s19
      %s21 = sphi 0, %s19
      %s22 = sphi 0, %s21
      %s36 = sphi 0, %s22
      %s42 = sphi 0, %s44
      %s45 = sphi 0, %s42
      %s46 = sphi 0, %s45
      %s62 = sphi 0, %s46
    $region4: #{tpu_custom_call.1} parent=1 // loop_header_branch
      %14 = sbr.rel (%p12) target = $region8
    $region5: #{tpu_custom_call.1} parent=1 // loop_body
      %s16 = ssub.s32 %s11, 1
      %s17 = ssub.s32 %s11, 2
      %s18 = sadd.s32 %s11, 1
      %s20 = sadd.s32 %s19, 1
      %p23 = scmp.eq.s32.totalorder %s11, 1
      %p24 = scmp.ne.s32.totalorder %s19, %s21
      %p25 = scmp.eq.s32.totalorder %s11, 0
      %p26 = por %p24, %p25
      %p27 = scmp.ne.s32.totalorder %s19, %s21
      %p28 = scmp.eq.s32.totalorder %s16, 1
      %p29 = por %p27, %p28
      %p30 = scmp.ne.s32.totalorder %s21, %s22
      %p31 = scmp.eq.s32.totalorder %s16, 0
      %p32 = por %p30, %p31
      %p33 = scmp.ne.s32.totalorder %s21, %s22
      %p34 = scmp.eq.s32.totalorder %s17, 1
      %p35 = por %p33, %p34
      %p37 = scmp.ne.s32.totalorder %s22, %s36
      %p38 = scmp.eq.s32.totalorder %s17, 0
      %p39 = por %p37, %p38
      %s40 = ssub.s32 %s11, %s18
      %p41 = scmp.eq.s32.totalorder %s40, 0
      %s43 = sadd.s32 %s42, 1
      %s44 = scalar_select %p41, %s42, %s43
      %p47 = pneg %p41
      %p48 = scmp.eq.s32.totalorder %s11, 1
      %p49 = por %p47, %p48
      %p50 = scmp.ne.s32.totalorder %s42, %s45
      %p51 = scmp.eq.s32.totalorder %s11, 0
      %p52 = por %p50, %p51
      %p53 = scmp.ne.s32.totalorder %s42, %s45
      %p54 = scmp.eq.s32.totalorder %s16, 1
      %p55 = por %p53, %p54
      %p56 = scmp.ne.s32.totalorder %s45, %s46
      %p57 = scmp.eq.s32.totalorder %s16, 0
      %p58 = por %p56, %p57
      %p59 = scmp.ne.s32.totalorder %s45, %s46
      %p60 = scmp.eq.s32.totalorder %s17, 1
      %p61 = por %p59, %p60
      %p63 = scmp.ne.s32.totalorder %s46, %s62
      %p64 = scmp.eq.s32.totalorder %s17, 0
      %p65 = por %p63, %p64
      %p66 = scmp.le.s32.totalorder 1, %s11
      %p67 = scmp.lt.s32.totalorder %s11, 3
      %p68 = pnand %p66, %p67
      %p69 = pneg %p68
      // Predicated region
      $region9: #{tpu_custom_call.1} parent=5 // pred_check
        _
      $region10: #{tpu_custom_call.1} parent=5 // pred_check_branch
        %71 = sbr.rel (%p68) target = $region12
      $region11: #{tpu_custom_call.1} parent=5 // pred_region
        %s72 = ssub.s32 %s11, 1
        // Predicated region
        $region13: #{tpu_custom_call.1} parent=11 // pred_check
          %p73 = pneg %p32
        $region14: #{tpu_custom_call.1} parent=11 // pred_check_branch
          %75 = sbr.rel (%p73) target = $region16
        $region15: #{tpu_custom_call.1} parent=11 // pred_region
          %s77 = ssub.s32 128, 128
          %78 = vsyncadd [#allocation3], %s77
          %s80 = sshll.u32 [#allocation2], 4
          %s81 = int_to_ptr.vmem [resolvable:$true] %s80
          %83 = dma.hbm_to_vmem [thread:$0]  %s0, 128, %s81, [#allocation3]
        $region16: #{tpu_custom_call.1} parent=11 // pred_fallthru
          _
      $region12: #{tpu_custom_call.1} parent=5 // pred_fallthru
        _
      %p84 = scmp.lt.s32.totalorder %s11, 2
      // Predicated region
      $region17: #{tpu_custom_call.1} parent=5 // pred_check
        %p85 = pneg %p84
      $region18: #{tpu_custom_call.1} parent=5 // pred_check_branch
        %87 = sbr.rel (%p85) target = $region20
      $region19: #{tpu_custom_call.1} parent=5 // pred_region
        _
      $region20: #{tpu_custom_call.1} parent=5 // pred_fallthru
        _
      %p88 = scmp.le.s32.totalorder 1, %s11
      %p89 = scmp.lt.s32.totalorder %s11, 3
      %p90 = pnand %p88, %p89
      %p91 = pneg %p90
      // Predicated region
      $region21: #{tpu_custom_call.1} parent=5 // pred_check
        _
      $region22: #{tpu_custom_call.1} parent=5 // pred_check_branch
        %93 = sbr.rel (%p90) target = $region24
      $region23: #{tpu_custom_call.1} parent=5 // pred_region
        %s94 = ssub.s32 %s11, 1
        // Predicated region
        $region25: #{tpu_custom_call.1} parent=23 // pred_check
          %p95 = pneg %p32
        $region26: #{tpu_custom_call.1} parent=23 // pred_check_branch
          %97 = sbr.rel (%p95) target = $region28
        $region27: #{tpu_custom_call.1} parent=23 // pred_region
          %98 = dma.done [#allocation3], 128
        $region28: #{tpu_custom_call.1} parent=23 // pred_fallthru
          _
        %p99 = pneg %p32
        %p100 = pneg %p29
        %p101 = pneg %p58
        %p102 = pneg %p55
        %s103 = sand.u32 %s45, 1
        %s104 = scalar_lea.sflag [#allocation4], %s103
        %s105 = sand.u32 %s45, 1
        %s106 = smul.addr %s105, 8
        %s107 = scalar_lea.vmem [#allocation5], %s106
        %v108 = vld [vmem:[#allocation2] sm:$0xff]
        %109 = vst [vmem:[%s107] sm:$0xff] %v108
        %s110 = sand.u32 %s45, 1
        %s111 = scalar_lea.sflag [#allocation4], %s110
        %s112 = sand.u32 %s45, 1
        %s113 = smul.addr %s112, 8
        %s114 = scalar_lea.vmem [#allocation5], %s113
        // Predicated region
        $region29: #{tpu_custom_call.1} parent=23 // pred_check
          %p115 = pneg %p55
        $region30: #{tpu_custom_call.1} parent=23 // pred_check_branch
          %117 = sbr.rel (%p115) target = $region32
        $region31: #{tpu_custom_call.1} parent=23 // pred_region
          %s119 = ssub.s32 128, 128
          %120 = vsyncadd %s111, %s119
          %s121 = smul.addr %s16, 128
          %s122 = scalar_lea.hbm %s1, %s121
          %s124 = sshll.u32 %s114, 4
          %s125 = int_to_ptr.vmem [resolvable:$true] %s124
          %127 = dma.vmem_to_hbm [thread:$0]  %s125, 128, %s122, %s111
        $region32: #{tpu_custom_call.1} parent=23 // pred_fallthru
          _
      $region24: #{tpu_custom_call.1} parent=5 // pred_fallthru
        _
      %p128 = scmp.le.s32.totalorder 2, %s11
      // Predicated region
      $region33: #{tpu_custom_call.1} parent=5 // pred_check
        %p129 = pneg %p128
      $region34: #{tpu_custom_call.1} parent=5 // pred_check_branch
        %131 = sbr.rel (%p129) target = $region36
      $region35: #{tpu_custom_call.1} parent=5 // pred_region
        %s132 = ssub.s32 %s11, 2
        // Predicated region
        $region37: #{tpu_custom_call.1} parent=35 // pred_check
          %p133 = pneg %p61
        $region38: #{tpu_custom_call.1} parent=35 // pred_check_branch
          %135 = sbr.rel (%p133) target = $region40
        $region39: #{tpu_custom_call.1} parent=35 // pred_region
          %s136 = sand.u32 %s46, 1
          %s137 = scalar_lea.sflag [#allocation4], %s136
          %s138 = sand.u32 %s46, 1
          %s139 = smul.addr %s138, 8
          %s140 = scalar_lea.vmem [#allocation5], %s139
          %141 = dma.done %s137, 128
        $region40: #{tpu_custom_call.1} parent=35 // pred_fallthru
          _
      $region36: #{tpu_custom_call.1} parent=5 // pred_fallthru
        _
    $region6: #{tpu_custom_call.1} parent=1 // loop_footer
      %s15 = sadd.s32 1, %s11
    $region7: #{tpu_custom_call.1} parent=1 // loop_footer_branch
      %10 = sbr.rel target = $region3
    $region8: #{tpu_custom_call.1} parent=1 // loop_exit
      _
    %142 = vsyncpa [#allocation3], 1
    %s143 = scalar_lea.sflag [#allocation3], 1
    %144 = vsyncpa %s143, 1
    %145 = vsyncpa [#allocation4], 1
    %s146 = scalar_lea.sflag [#allocation4], 1
    %147 = vsyncpa %s146, 1

// kernel: tpu_custom_call.1
$region0: #{tpu_custom_call.1}
  #allocation0 [shape = 'u32[]', space=smem, size = 0x4, offset = 0x4, fixed_abs, tag = 'smem constant byte address 0x4 - core index']
  #allocation1 [shape = 'u32[144,128]{1,0:T(1,128)}', space=vmem, size = 0x12000, scoped, tag = 'internal scratch']
  %s0 = inlined_call_operand.hbm [shape: bf16[16,32], index: 0, kind: input, shape index: {}]
  %s1 = inlined_call_operand.hbm [shape: bf16[32,32], index: 1, kind: input, shape index: {}]
  %s2 = inlined_call_operand.vmem [shape: f32[1,32], index: 2, kind: input, shape index: {}]
  %s3 = inlined_call_operand.hbm [shape: bf16[32,32], index: 3, kind: input, shape index: {}]
  %s4 = inlined_call_operand.vmem [shape: f32[1,32], index: 4, kind: input, shape index: {}]
  %s5 = inlined_call_operand.hbm [shape: bf16[32,32], index: 5, kind: input, shape index: {}]
  %s6 = inlined_call_operand.vmem [shape: f32[1,32], index: 6, kind: input, shape index: {}]
  %s7 = inlined_call_operand.hbm [shape: bf16[16,32], index: 7, kind: output, shape index: {0}]
  %s8 = inlined_call_operand.hbm [shape: bf16[16,32], index: 8, kind: output, shape index: {1}]
  %s9 = inlined_call_operand.hbm [shape: bf16[16,32], index: 9, kind: output, shape index: {2}]
  %10 = xla_tuple %s7, %s8, %s9
  %s11 = sld [smem:[#allocation0]]
  $region93: #{tpu_custom_call.1} parent=0
    _
  %s13 = ssub.s32 1, %s11
  %s14 = scalar_select 0, %s13, %s11
  $region1: #{tpu_custom_call.1} parent=0
    #allocation2 [shape = 'u8[4096]{0}', space=vmem, size = 0x1000, scoped, tag = 'input window, operand 0']
    #allocation3 [shape = 's32[2]{0}', space=sflag, size = 0x8, scoped, tag = 'scoped memory for tpu_custom_call.1']
    #allocation4 [shape = 's32[2]{0}', space=sflag, size = 0x8, scoped, tag = 'scoped memory for tpu_custom_call.1']
    #allocation5 [shape = 'u8[8192]{0}', space=vmem, size = 0x2000, scoped, tag = 'input window, operand 1, single buffered']
    #allocation6 [shape = 's32[1]{0}', space=sflag, size = 0x4, scoped, tag = 'scoped memory for tpu_custom_call.1']
    #allocation7 [shape = 'u8[8192]{0}', space=vmem, size = 0x2000, scoped, tag = 'input window, operand 3, single buffered']
    #allocation8 [shape = 'u8[8192]{0}', space=vmem, size = 0x2000, scoped, tag = 'input window, operand 5, single buffered']
    #allocation9 [shape = 's32[1]{0}', space=sflag, size = 0x4, scoped, tag = 'scoped memory for tpu_custom_call.1']
    #allocation10 [shape = 'u8[4096]{0}', space=vmem, size = 0x1000, scoped, tag = 'output window, operand 0']
    #allocation11 [shape = 'u8[4096]{0}', space=vmem, size = 0x1000, scoped, tag = 'output window, operand 1']
    #allocation12 [shape = 's32[2]{0}', space=sflag, size = 0x8, scoped, tag = 'scoped memory for tpu_custom_call.1']
    #allocation13 [shape = 'u8[4096]{0}', space=vmem, size = 0x1000, scoped, tag = 'output window, operand 2']
    %15 = vsyncpa [#allocation3], 0
    %s16 = scalar_lea.sflag [#allocation3], 1
    %17 = vsyncpa %s16, 0
    %18 = vsyncpa [#allocation6], 0
    %19 = vsyncpa [#allocation9], 0
    %20 = vsyncpa [#allocation4], 0
    %s21 = scalar_lea.sflag [#allocation4], 1
    %22 = vsyncpa %s21, 0
    %23 = vsyncpa [#allocation12], 0
    %s24 = scalar_lea.sflag [#allocation12], 1
    %25 = vsyncpa %s24, 0
    loop: start=0, step=1, limit=4
    $region2: #{tpu_custom_call.1} parent=1 // loop_pre_header
      _
    $region3: #{tpu_custom_call.1} parent=1 // loop_header
      %s27 = sphi 0, %s31
      %p28 = scmp.ge.s32.totalorder %s27, 4
      %s37 = sphi 0, %s39
      %s40 = sphi 0, %s37
      %s41 = sphi 0, %s40
      %s57 = sphi 0, %s41
      %s61 = sphi 0, %s61
      %s63 = sphi 0, %s61
      %s64 = sphi 0, %s63
      %s78 = sphi 0, %s64
      %s82 = sphi 0, %s82
      %s84 = sphi 0, %s82
      %s85 = sphi 0, %s84
      %s99 = sphi 0, %s85
      %s103 = sphi 0, %s103
      %s105 = sphi 0, %s103
      %s106 = sphi 0, %s105
      %s120 = sphi 0, %s106
      %s124 = sphi 0, %s124
      %s126 = sphi 0, %s124
      %s127 = sphi 0, %s126
      %s141 = sphi 0, %s127
      %s145 = sphi 0, %s145
      %s147 = sphi 0, %s145
      %s148 = sphi 0, %s147
      %s162 = sphi 0, %s148
      %s166 = sphi 0, %s166
      %s168 = sphi 0, %s166
      %s169 = sphi 0, %s168
      %s183 = sphi 0, %s169
      %s189 = sphi 0, %s191
      %s192 = sphi 0, %s189
      %s193 = sphi 0, %s192
      %s209 = sphi 0, %s193
      %s215 = sphi 0, %s217
      %s218 = sphi 0, %s215
      %s219 = sphi 0, %s218
      %s235 = sphi 0, %s219
      %s241 = sphi 0, %s243
      %s244 = sphi 0, %s241
      %s245 = sphi 0, %s244
      %s261 = sphi 0, %s245
    $region4: #{tpu_custom_call.1} parent=1 // loop_header_branch
      %30 = sbr.rel (%p28) target = $region8
    $region5: #{tpu_custom_call.1} parent=1 // loop_body
      %s32 = ssub.s32 %s27, 1
      %s33 = ssub.s32 %s27, 2
      %s34 = sadd.s32 %s27, 1
      %s35 = ssub.s32 %s27, %s34
      %p36 = scmp.eq.s32.totalorder %s35, 0
      %s38 = sadd.s32 %s37, 1
      %s39 = scalar_select %p36, %s37, %s38
      %p42 = pneg %p36
      %p43 = scmp.eq.s32.totalorder %s27, 1
      %p44 = por %p42, %p43
      %p45 = scmp.ne.s32.totalorder %s37, %s40
      %p46 = scmp.eq.s32.totalorder %s27, 0
      %p47 = por %p45, %p46
      %p48 = scmp.ne.s32.totalorder %s37, %s40
      %p49 = scmp.eq.s32.totalorder %s32, 1
      %p50 = por %p48, %p49
      %p51 = scmp.ne.s32.totalorder %s40, %s41
      %p52 = scmp.eq.s32.totalorder %s32, 0
      %p53 = por %p51, %p52
      %p54 = scmp.ne.s32.totalorder %s40, %s41
      %p55 = scmp.eq.s32.totalorder %s33, 1
      %p56 = por %p54, %p55
      %p58 = scmp.ne.s32.totalorder %s41, %s57
      %p59 = scmp.eq.s32.totalorder %s33, 0
      %p60 = por %p58, %p59
      %s62 = sadd.s32 %s61, 1
      %p65 = scmp.eq.s32.totalorder %s27, 1
      %p66 = scmp.ne.s32.totalorder %s61, %s63
      %p67 = scmp.eq.s32.totalorder %s27, 0
      %p68 = por %p66, %p67
      %p69 = scmp.ne.s32.totalorder %s61, %s63
      %p70 = scmp.eq.s32.totalorder %s32, 1
      %p71 = por %p69, %p70
      %p72 = scmp.ne.s32.totalorder %s63, %s64
      %p73 = scmp.eq.s32.totalorder %s32, 0
      %p74 = por %p72, %p73
      %p75 = scmp.ne.s32.totalorder %s63, %s64
      %p76 = scmp.eq.s32.totalorder %s33, 1
      %p77 = por %p75, %p76
      %p79 = scmp.ne.s32.totalorder %s64, %s78
      %p80 = scmp.eq.s32.totalorder %s33, 0
      %p81 = por %p79, %p80
      %s83 = sadd.s32 %s82, 1
      %p86 = scmp.eq.s32.totalorder %s27, 1
      %p87 = scmp.ne.s32.totalorder %s82, %s84
      %p88 = scmp.eq.s32.totalorder %s27, 0
      %p89 = por %p87, %p88
      %p90 = scmp.ne.s32.totalorder %s82, %s84
      %p91 = scmp.eq.s32.totalorder %s32, 1
      %p92 = por %p90, %p91
      %p93 = scmp.ne.s32.totalorder %s84, %s85
      %p94 = scmp.eq.s32.totalorder %s32, 0
      %p95 = por %p93, %p94
      %p96 = scmp.ne.s32.totalorder %s84, %s85
      %p97 = scmp.eq.s32.totalorder %s33, 1
      %p98 = por %p96, %p97
      %p100 = scmp.ne.s32.totalorder %s85, %s99
      %p101 = scmp.eq.s32.totalorder %s33, 0
      %p102 = por %p100, %p101
      %s104 = sadd.s32 %s103, 1
      %p107 = scmp.eq.s32.totalorder %s27, 1
      %p108 = scmp.ne.s32.totalorder %s103, %s105
      %p109 = scmp.eq.s32.totalorder %s27, 0
      %p110 = por %p108, %p109
      %p111 = scmp.ne.s32.totalorder %s103, %s105
      %p112 = scmp.eq.s32.totalorder %s32, 1
      %p113 = por %p111, %p112
      %p114 = scmp.ne.s32.totalorder %s105, %s106
      %p115 = scmp.eq.s32.totalorder %s32, 0
      %p116 = por %p114, %p115
      %p117 = scmp.ne.s32.totalorder %s105, %s106
      %p118 = scmp.eq.s32.totalorder %s33, 1
      %p119 = por %p117, %p118
      %p121 = scmp.ne.s32.totalorder %s106, %s120
      %p122 = scmp.eq.s32.totalorder %s33, 0
      %p123 = por %p121, %p122
      %s125 = sadd.s32 %s124, 1
      %p128 = scmp.eq.s32.totalorder %s27, 1
      %p129 = scmp.ne.s32.totalorder %s124, %s126
      %p130 = scmp.eq.s32.totalorder %s27, 0
      %p131 = por %p129, %p130
      %p132 = scmp.ne.s32.totalorder %s124, %s126
      %p133 = scmp.eq.s32.totalorder %s32, 1
      %p134 = por %p132, %p133
      %p135 = scmp.ne.s32.totalorder %s126, %s127
      %p136 = scmp.eq.s32.totalorder %s32, 0
      %p137 = por %p135, %p136
      %p138 = scmp.ne.s32.totalorder %s126, %s127
      %p139 = scmp.eq.s32.totalorder %s33, 1
      %p140 = por %p138, %p139
      %p142 = scmp.ne.s32.totalorder %s127, %s141
      %p143 = scmp.eq.s32.totalorder %s33, 0
      %p144 = por %p142, %p143
      %s146 = sadd.s32 %s145, 1
      %p149 = scmp.eq.s32.totalorder %s27, 1
      %p150 = scmp.ne.s32.totalorder %s145, %s147
      %p151 = scmp.eq.s32.totalorder %s27, 0
      %p152 = por %p150, %p151
      %p153 = scmp.ne.s32.totalorder %s145, %s147
      %p154 = scmp.eq.s32.totalorder %s32, 1
      %p155 = por %p153, %p154
      %p156 = scmp.ne.s32.totalorder %s147, %s148
      %p157 = scmp.eq.s32.totalorder %s32, 0
      %p158 = por %p156, %p157
      %p159 = scmp.ne.s32.totalorder %s147, %s148
      %p160 = scmp.eq.s32.totalorder %s33, 1
      %p161 = por %p159, %p160
      %p163 = scmp.ne.s32.totalorder %s148, %s162
      %p164 = scmp.eq.s32.totalorder %s33, 0
      %p165 = por %p163, %p164
      %s167 = sadd.s32 %s166, 1
      %p170 = scmp.eq.s32.totalorder %s27, 1
      %p171 = scmp.ne.s32.totalorder %s166, %s168
      %p172 = scmp.eq.s32.totalorder %s27, 0
      %p173 = por %p171, %p172
      %p174 = scmp.ne.s32.totalorder %s166, %s168
      %p175 = scmp.eq.s32.totalorder %s32, 1
      %p176 = por %p174, %p175
      %p177 = scmp.ne.s32.totalorder %s168, %s169
      %p178 = scmp.eq.s32.totalorder %s32, 0
      %p179 = por %p177, %p178
      %p180 = scmp.ne.s32.totalorder %s168, %s169
      %p181 = scmp.eq.s32.totalorder %s33, 1
      %p182 = por %p180, %p181
      %p184 = scmp.ne.s32.totalorder %s169, %s183
      %p185 = scmp.eq.s32.totalorder %s33, 0
      %p186 = por %p184, %p185
      %s187 = ssub.s32 %s27, %s34
      %p188 = scmp.eq.s32.totalorder %s187, 0
      %s190 = sadd.s32 %s189, 1
      %s191 = scalar_select %p188, %s189, %s190
      %p194 = pneg %p188
      %p195 = scmp.eq.s32.totalorder %s27, 1
      %p196 = por %p194, %p195
      %p197 = scmp.ne.s32.totalorder %s189, %s192
      %p198 = scmp.eq.s32.totalorder %s27, 0
      %p199 = por %p197, %p198
      %p200 = scmp.ne.s32.totalorder %s189, %s192
      %p201 = scmp.eq.s32.totalorder %s32, 1
      %p202 = por %p200, %p201
      %p203 = scmp.ne.s32.totalorder %s192, %s193
      %p204 = scmp.eq.s32.totalorder %s32, 0
      %p205 = por %p203, %p204
      %p206 = scmp.ne.s32.totalorder %s192, %s193
      %p207 = scmp.eq.s32.totalorder %s33, 1
      %p208 = por %p206, %p207
      %p210 = scmp.ne.s32.totalorder %s193, %s209
      %p211 = scmp.eq.s32.totalorder %s33, 0
      %p212 = por %p210, %p211
      %s213 = ssub.s32 %s27, %s34
      %p214 = scmp.eq.s32.totalorder %s213, 0
      %s216 = sadd.s32 %s215, 1
      %s217 = scalar_select %p214, %s215, %s216
      %p220 = pneg %p214
      %p221 = scmp.eq.s32.totalorder %s27, 1
      %p222 = por %p220, %p221
      %p223 = scmp.ne.s32.totalorder %s215, %s218
      %p224 = scmp.eq.s32.totalorder %s27, 0
      %p225 = por %p223, %p224
      %p226 = scmp.ne.s32.totalorder %s215, %s218
      %p227 = scmp.eq.s32.totalorder %s32, 1
      %p228 = por %p226, %p227
      %p229 = scmp.ne.s32.totalorder %s218, %s219
      %p230 = scmp.eq.s32.totalorder %s32, 0
      %p231 = por %p229, %p230
      %p232 = scmp.ne.s32.totalorder %s218, %s219
      %p233 = scmp.eq.s32.totalorder %s33, 1
      %p234 = por %p232, %p233
      %p236 = scmp.ne.s32.totalorder %s219, %s235
      %p237 = scmp.eq.s32.totalorder %s33, 0
      %p238 = por %p236, %p237
      %s239 = ssub.s32 %s27, %s34
      %p240 = scmp.eq.s32.totalorder %s239, 0
      %s242 = sadd.s32 %s241, 1
      %s243 = scalar_select %p240, %s241, %s242
      %p246 = pneg %p240
      %p247 = scmp.eq.s32.totalorder %s27, 1
      %p248 = por %p246, %p247
      %p249 = scmp.ne.s32.totalorder %s241, %s244
      %p250 = scmp.eq.s32.totalorder %s27, 0
      %p251 = por %p249, %p250
      %p252 = scmp.ne.s32.totalorder %s241, %s244
      %p253 = scmp.eq.s32.totalorder %s32, 1
      %p254 = por %p252, %p253
      %p255 = scmp.ne.s32.totalorder %s244, %s245
      %p256 = scmp.eq.s32.totalorder %s32, 0
      %p257 = por %p255, %p256
      %p258 = scmp.ne.s32.totalorder %s244, %s245
      %p259 = scmp.eq.s32.totalorder %s33, 1
      %p260 = por %p258, %p259
      %p262 = scmp.ne.s32.totalorder %s245, %s261
      %p263 = scmp.eq.s32.totalorder %s33, 0
      %p264 = por %p262, %p263
      %p265 = scmp.le.s32.totalorder 1, %s27
      %p266 = scmp.lt.s32.totalorder %s27, 3
      %p267 = pnand %p265, %p266
      %p268 = pneg %p267
      // Predicated region
      $region9: #{tpu_custom_call.1} parent=5 // pred_check
        _
      $region10: #{tpu_custom_call.1} parent=5 // pred_check_branch
        %270 = sbr.rel (%p267) target = $region12
      $region11: #{tpu_custom_call.1} parent=5 // pred_region
        %s271 = ssub.s32 %s27, 1
        // Predicated region
        $region13: #{tpu_custom_call.1} parent=11 // pred_check
          %p272 = pneg %p74
        $region14: #{tpu_custom_call.1} parent=11 // pred_check_branch
          %274 = sbr.rel (%p272) target = $region16
        $region15: #{tpu_custom_call.1} parent=11 // pred_region
          %s276 = ssub.s32 256, 256
          %277 = vsyncadd [#allocation6], %s276
          %s278 = sshll.u32 [#allocation5], 4
          %s279 = int_to_ptr.vmem [resolvable:$true] %s278
          %284 = dma.hbm_to_vmem [thread:$0]  %s1, 256, %s279, [#allocation6], 64, 64, 4
        $region16: #{tpu_custom_call.1} parent=11 // pred_fallthru
          _
        // Predicated region
        $region17: #{tpu_custom_call.1} parent=11 // pred_check
          %p285 = pneg %p95
        $region18: #{tpu_custom_call.1} parent=11 // pred_check_branch
          %287 = sbr.rel (%p285) target = $region20
        $region19: #{tpu_custom_call.1} parent=11 // pred_region
          _
        $region20: #{tpu_custom_call.1} parent=11 // pred_fallthru
          _
        // Predicated region
        $region21: #{tpu_custom_call.1} parent=11 // pred_check
          %p288 = pneg %p116
        $region22: #{tpu_custom_call.1} parent=11 // pred_check_branch
          %290 = sbr.rel (%p288) target = $region24
        $region23: #{tpu_custom_call.1} parent=11 // pred_region
          %s292 = ssub.s32 256, 256
          %293 = vsyncadd [#allocation6], %s292
          %s294 = sshll.u32 [#allocation7], 4
          %s295 = int_to_ptr.vmem [resolvable:$true] %s294
          %300 = dma.hbm_to_vmem [thread:$0]  %s3, 256, %s295, [#allocation6], 64, 64, 4
        $region24: #{tpu_custom_call.1} parent=11 // pred_fallthru
          _
        // Predicated region
        $region25: #{tpu_custom_call.1} parent=11 // pred_check
          %p301 = pneg %p137
        $region26: #{tpu_custom_call.1} parent=11 // pred_check_branch
          %303 = sbr.rel (%p301) target = $region28
        $region27: #{tpu_custom_call.1} parent=11 // pred_region
          _
        $region28: #{tpu_custom_call.1} parent=11 // pred_fallthru
          _
        // Predicated region
        $region29: #{tpu_custom_call.1} parent=11 // pred_check
          %p304 = pneg %p158
        $region30: #{tpu_custom_call.1} parent=11 // pred_check_branch
          %306 = sbr.rel (%p304) target = $region32
        $region31: #{tpu_custom_call.1} parent=11 // pred_region
          %s308 = ssub.s32 256, 256
          %309 = vsyncadd [#allocation9], %s308
          %s310 = sshll.u32 [#allocation8], 4
          %s311 = int_to_ptr.vmem [resolvable:$true] %s310
          %316 = dma.hbm_to_vmem [thread:$0]  %s5, 256, %s311, [#allocation9], 64, 64, 4
        $region32: #{tpu_custom_call.1} parent=11 // pred_fallthru
          _
        // Predicated region
        $region33: #{tpu_custom_call.1} parent=11 // pred_check
          %p317 = pneg %p179
        $region34: #{tpu_custom_call.1} parent=11 // pred_check_branch
          %319 = sbr.rel (%p317) target = $region36
        $region35: #{tpu_custom_call.1} parent=11 // pred_region
          _
        $region36: #{tpu_custom_call.1} parent=11 // pred_fallthru
          _
      $region12: #{tpu_custom_call.1} parent=5 // pred_fallthru
        _
      %p320 = scmp.lt.s32.totalorder %s27, 2
      // Predicated region
      $region37: #{tpu_custom_call.1} parent=5 // pred_check
        %p321 = pneg %p320
      $region38: #{tpu_custom_call.1} parent=5 // pred_check_branch
        %323 = sbr.rel (%p321) target = $region40
      $region39: #{tpu_custom_call.1} parent=5 // pred_region
        // Predicated region
        $region41: #{tpu_custom_call.1} parent=39 // pred_check
          %p324 = pneg %p47
        $region42: #{tpu_custom_call.1} parent=39 // pred_check_branch
          %326 = sbr.rel (%p324) target = $region44
        $region43: #{tpu_custom_call.1} parent=39 // pred_region
          %s327 = sand.u32 %s37, 1
          %s328 = scalar_lea.sflag [#allocation3], %s327
          %s329 = sand.u32 %s37, 1
          %s330 = smul.addr %s329, 4
          %s331 = scalar_lea.vmem [#allocation2], %s330
          %s333 = ssub.s32 64, 64
          %334 = vsyncadd %s328, %s333
          %s335 = smul.addr %s27, 64
          %s336 = scalar_lea.hbm %s0, %s335
          %s338 = sshll.u32 %s331, 4
          %s339 = int_to_ptr.vmem [resolvable:$true] %s338
          %341 = dma.hbm_to_vmem [thread:$0]  %s336, 64, %s339, %s328
        $region44: #{tpu_custom_call.1} parent=39 // pred_fallthru
          _
      $region40: #{tpu_custom_call.1} parent=5 // pred_fallthru
        _
      %p342 = scmp.le.s32.totalorder 1, %s27
      %p343 = scmp.lt.s32.totalorder %s27, 3
      %p344 = pnand %p342, %p343
      %p345 = pneg %p344
      // Predicated region
      $region45: #{tpu_custom_call.1} parent=5 // pred_check
        _
      $region46: #{tpu_custom_call.1} parent=5 // pred_check_branch
        %347 = sbr.rel (%p344) target = $region48
      $region47: #{tpu_custom_call.1} parent=5 // pred_region
        %s348 = ssub.s32 %s27, 1
        %s349 = sand.u32 %s40, 1
        %s350 = scalar_lea.sflag [#allocation3], %s349
        %s351 = sand.u32 %s40, 1
        %s352 = smul.addr %s351, 4
        %s353 = scalar_lea.vmem [#allocation2], %s352
        // Predicated region
        $region49: #{tpu_custom_call.1} parent=47 // pred_check
          %p354 = pneg %p53
        $region50: #{tpu_custom_call.1} parent=47 // pred_check_branch
          %356 = sbr.rel (%p354) target = $region52
        $region51: #{tpu_custom_call.1} parent=47 // pred_region
          %357 = dma.done %s350, 64
        $region52: #{tpu_custom_call.1} parent=47 // pred_fallthru
          _
        // Predicated region
        $region53: #{tpu_custom_call.1} parent=47 // pred_check
          %p358 = pneg %p74
        $region54: #{tpu_custom_call.1} parent=47 // pred_check_branch
          %360 = sbr.rel (%p358) target = $region56
        $region55: #{tpu_custom_call.1} parent=47 // pred_region
          %361 = dma.done [#allocation6], 256
        $region56: #{tpu_custom_call.1} parent=47 // pred_fallthru
          _
        // Predicated region
        $region57: #{tpu_custom_call.1} parent=47 // pred_check
          %p362 = pneg %p116
        $region58: #{tpu_custom_call.1} parent=47 // pred_check_branch
          %364 = sbr.rel (%p362) target = $region60
        $region59: #{tpu_custom_call.1} parent=47 // pred_region
          %365 = dma.done [#allocation6], 256
        $region60: #{tpu_custom_call.1} parent=47 // pred_fallthru
          _
        // Predicated region
        $region61: #{tpu_custom_call.1} parent=47 // pred_check
          %p366 = pneg %p158
        $region62: #{tpu_custom_call.1} parent=47 // pred_check_branch
          %368 = sbr.rel (%p366) target = $region64
        $region63: #{tpu_custom_call.1} parent=47 // pred_region
          %369 = dma.done [#allocation9], 256
        $region64: #{tpu_custom_call.1} parent=47 // pred_fallthru
          _
        %s370 = sand.u32 %s40, 1
        %s371 = scalar_lea.sflag [#allocation3], %s370
        %s372 = sand.u32 %s40, 1
        %s373 = smul.addr %s372, 4
        %s374 = scalar_lea.vmem [#allocation2], %s373
        %p375 = pneg %p53
        %p376 = pneg %p50
        %p377 = pneg %p74
        %p378 = pneg %p71
        %p379 = pneg %p95
        %p380 = pneg %p92
        %p381 = pneg %p116
        %p382 = pneg %p113
        %p383 = pneg %p137
        %p384 = pneg %p134
        %p385 = pneg %p158
        %p386 = pneg %p155
        %p387 = pneg %p179
        %p388 = pneg %p176
        %p389 = pneg %p205
        %p390 = pneg %p202
        %s391 = sand.u32 %s192, 1
        %s392 = scalar_lea.sflag [#allocation4], %s391
        %s393 = sand.u32 %s192, 1
        %s394 = smul.addr %s393, 4
        %s395 = scalar_lea.vmem [#allocation10], %s394
        %p396 = pneg %p231
        %p397 = pneg %p228
        %s398 = sand.u32 %s32, 1
        %s399 = scalar_lea.sflag [#allocation12], %s398
        %s400 = sand.u32 %s218, 1
        %s401 = smul.addr %s400, 4
        %s402 = scalar_lea.vmem [#allocation11], %s401
        %p403 = pneg %p257
        %p404 = pneg %p254
        %s405 = sand.u32 %s32, 1
        %s406 = scalar_lea.sflag [#allocation12], %s405
        %s407 = sand.u32 %s244, 1
        %s408 = smul.addr %s407, 4
        %s409 = scalar_lea.vmem [#allocation13], %s408
        %v411 = vld [vmem:[%s353] sm:$0xf]
        %v412 = vld [vmem:[#allocation5] sm:$0xf]
        %v413 = vld [vmem:[#allocation5 + $0x4] sm:$0xf]
        %v414 = vld [vmem:[#allocation5 + $0x8] sm:$0xf]
        %v415 = vld [vmem:[#allocation5 + $0xc] sm:$0xf]
        %v416 = vld [vmem:[%s2] sm:$0x1]
        %v418 = vlaneseq
        %v419 = vshrl.u32 %v418, 7
        %v420 = vsub.s32 0, %v419
        %v421 = vrot.slane %v416, %v420
        %v427 = vunpack.c.l.b16 %v412
        %v428 = vunpack.c.l.b16 %v413
        %v429 = vunpack.c.l.b16 %v414
        %v430 = vunpack.c.l.b16 %v415
        %v431 = vpack.c.b16 %v428, %v427
        %v432 = vpack.c.b16 %v430, %v429
        %vm435 = vcmask 261120
        %v437 = vsel %vm435, %v411, 0
        %439 = vmatprep.subr.bf16.mxu0 0
        %440 = vmatpush1.bf16.msra.mxu0 0
        %441 = vmatprep.subr.bf16.mxu0 0
        %442 = vmatpush1.bf16.msra.mxu0 0
        %443 = vmatprep.subr.bf16.mxu0 0
        %444 = vmatpush1.bf16.msra.mxu0 0
        %445 = vmatprep.subr.bf16.mxu0 0
        %446 = vmatpush1.bf16.msra.mxu0 0
        %447 = vmatprep.subr.bf16.mxu0 0
        %448 = vmatpush1.bf16.msra.mxu0 0
        %449 = vmatprep.subr.bf16.mxu0 0
        %450 = vmatpush1.bf16.msra.mxu0 0
        %451 = vmatprep.subr.bf16.mxu0 0
        %452 = vmatpush1.bf16.msra.mxu0 %v432
        %453 = vmatprep.subr.bf16.mxu0 0
        %454 = vmatpush1.bf16.msra.mxu0 %v431
        %455 = vmatprep.subr.bf16.mxu0 0
        %456 = vmatpush2.bf16.msra.mxu0 0
        %457 = vmatprep.subr.bf16.mxu0 0
        %458 = vmatpush2.bf16.msra.mxu0 0
        %459 = vmatprep.subr.bf16.mxu0 0
        %460 = vmatpush2.bf16.msra.mxu0 0
        %461 = vmatprep.subr.bf16.mxu0 0
        %462 = vmatpush2.bf16.msra.mxu0 0
        %463 = vmatprep.subr.bf16.mxu0 0
        %464 = vmatpush2.bf16.msra.mxu0 0
        %465 = vmatprep.subr.bf16.mxu0 0
        %466 = vmatpush2.bf16.msra.mxu0 0
        %467 = vmatprep.subr.bf16.mxu0 0
        %468 = vmatpush2.bf16.msra.mxu0 0
        %469 = vmatprep.subr.bf16.mxu0 0
        %470 = vmatpush2.bf16.msra.mxu0 0
        %471 = vmatprep.mubr.bf16.mxu0 0
        %472 = vmatmul.mubr.bf16.gmra.mxu0 %v437
        %v473 = vpop.f32.mrf.mxu0
        %v474 = vadd.f32 %v421, %v473
        %v475 = vpop.f32.mrf.mxu0
        %v476 = vpop.f32.mrf.mxu0
        %v477 = vpop.f32.mrf.mxu0
        %478 = vdwg.mxu0
        %v479 = vmul.f32 %v474, 0.35355338
        %v480 = vpack.c.bf16 %v479, %v479
        %vm481 = vcmask 257024
        %482 = vst.msk [vmem:[%s395] sm:$0xf] %vm481, %v480
        %v483 = vld [vmem:[#allocation7] sm:$0xf]
        %v484 = vld [vmem:[#allocation7 + $0x4] sm:$0xf]
        %v485 = vld [vmem:[#allocation7 + $0x8] sm:$0xf]
        %v486 = vld [vmem:[#allocation7 + $0xc] sm:$0xf]
        %v487 = vld [vmem:[%s4] sm:$0x1]
        %v489 = vlaneseq
        %v490 = vshrl.u32 %v489, 7
        %v491 = vsub.s32 0, %v490
        %v492 = vrot.slane %v487, %v491
        %v498 = vunpack.c.l.b16 %v483
        %v499 = vunpack.c.l.b16 %v484
        %v500 = vunpack.c.l.b16 %v485
        %v501 = vunpack.c.l.b16 %v486
        %v502 = vpack.c.b16 %v499, %v498
        %v503 = vpack.c.b16 %v501, %v500
        %506 = vmatprep.subr.bf16.mxu0 0
        %507 = vmatpush1.bf16.msra.mxu0 0
        %508 = vmatprep.subr.bf16.mxu0 0
        %509 = vmatpush1.bf16.msra.mxu0 0
        %510 = vmatprep.subr.bf16.mxu0 0
        %511 = vmatpush1.bf16.msra.mxu0 0
        %512 = vmatprep.subr.bf16.mxu0 0
        %513 = vmatpush1.bf16.msra.mxu0 0
        %514 = vmatprep.subr.bf16.mxu0 0
        %515 = vmatpush1.bf16.msra.mxu0 0
        %516 = vmatprep.subr.bf16.mxu0 0
        %517 = vmatpush1.bf16.msra.mxu0 0
        %518 = vmatprep.subr.bf16.mxu0 0
        %519 = vmatpush1.bf16.msra.mxu0 %v503
        %520 = vmatprep.subr.bf16.mxu0 0
        %521 = vmatpush1.bf16.msra.mxu0 %v502
        %522 = vmatprep.subr.bf16.mxu0 0
        %523 = vmatpush2.bf16.msra.mxu0 0
        %524 = vmatprep.subr.bf16.mxu0 0
        %525 = vmatpush2.bf16.msra.mxu0 0
        %526 = vmatprep.subr.bf16.mxu0 0
        %527 = vmatpush2.bf16.msra.mxu0 0
        %528 = vmatprep.subr.bf16.mxu0 0
        %529 = vmatpush2.bf16.msra.mxu0 0
        %530 = vmatprep.subr.bf16.mxu0 0
        %531 = vmatpush2.bf16.msra.mxu0 0
        %532 = vmatprep.subr.bf16.mxu0 0
        %533 = vmatpush2.bf16.msra.mxu0 0
        %534 = vmatprep.subr.bf16.mxu0 0
        %535 = vmatpush2.bf16.msra.mxu0 0
        %536 = vmatprep.subr.bf16.mxu0 0
        %537 = vmatpush2.bf16.msra.mxu0 0
        %538 = vmatprep.mubr.bf16.mxu0 0
        %539 = vmatmul.mubr.bf16.gmra.mxu0 %v437
        %v540 = vpop.f32.mrf.mxu0
        %v541 = vadd.f32 %v492, %v540
        %v542 = vpop.f32.mrf.mxu0
        %v543 = vpop.f32.mrf.mxu0
        %v544 = vpop.f32.mrf.mxu0
        %545 = vdwg.mxu0
        %v546 = vpack.c.bf16 %v541, %v541
        %547 = vst.msk [vmem:[%s402] sm:$0xf] %vm481, %v546
        %v548 = vld [vmem:[#allocation8] sm:$0xf]
        %v549 = vld [vmem:[#allocation8 + $0x4] sm:$0xf]
        %v550 = vld [vmem:[#allocation8 + $0x8] sm:$0xf]
        %v551 = vld [vmem:[#allocation8 + $0xc] sm:$0xf]
        %v552 = vld [vmem:[%s6] sm:$0x1]
        %v554 = vlaneseq
        %v555 = vshrl.u32 %v554, 7
        %v556 = vsub.s32 0, %v555
        %v557 = vrot.slane %v552, %v556
        %v563 = vunpack.c.l.b16 %v548
        %v564 = vunpack.c.l.b16 %v549
        %v565 = vunpack.c.l.b16 %v550
        %v566 = vunpack.c.l.b16 %v551
        %v567 = vpack.c.b16 %v564, %v563
        %v568 = vpack.c.b16 %v566, %v565
        %571 = vmatprep.subr.bf16.mxu0 0
        %572 = vmatpush1.bf16.msra.mxu0 0
        %573 = vmatprep.subr.bf16.mxu0 0
        %574 = vmatpush1.bf16.msra.mxu0 0
        %575 = vmatprep.subr.bf16.mxu0 0
        %576 = vmatpush1.bf16.msra.mxu0 0
        %577 = vmatprep.subr.bf16.mxu0 0
        %578 = vmatpush1.bf16.msra.mxu0 0
        %579 = vmatprep.subr.bf16.mxu0 0
        %580 = vmatpush1.bf16.msra.mxu0 0
        %581 = vmatprep.subr.bf16.mxu0 0
        %582 = vmatpush1.bf16.msra.mxu0 0
        %583 = vmatprep.subr.bf16.mxu0 0
        %584 = vmatpush1.bf16.msra.mxu0 %v568
        %585 = vmatprep.subr.bf16.mxu0 0
        %586 = vmatpush1.bf16.msra.mxu0 %v567
        %587 = vmatprep.subr.bf16.mxu0 0
        %588 = vmatpush2.bf16.msra.mxu0 0
        %589 = vmatprep.subr.bf16.mxu0 0
        %590 = vmatpush2.bf16.msra.mxu0 0
        %591 = vmatprep.subr.bf16.mxu0 0
        %592 = vmatpush2.bf16.msra.mxu0 0
        %593 = vmatprep.subr.bf16.mxu0 0
        %594 = vmatpush2.bf16.msra.mxu0 0
        %595 = vmatprep.subr.bf16.mxu0 0
        %596 = vmatpush2.bf16.msra.mxu0 0
        %597 = vmatprep.subr.bf16.mxu0 0
        %598 = vmatpush2.bf16.msra.mxu0 0
        %599 = vmatprep.subr.bf16.mxu0 0
        %600 = vmatpush2.bf16.msra.mxu0 0
        %601 = vmatprep.subr.bf16.mxu0 0
        %602 = vmatpush2.bf16.msra.mxu0 0
        %603 = vmatprep.mubr.bf16.mxu0 0
        %604 = vmatmul.mubr.bf16.gmra.mxu0 %v437
        %v605 = vpop.f32.mrf.mxu0
        %v606 = vadd.f32 %v557, %v605
        %v607 = vpop.f32.mrf.mxu0
        %v608 = vpop.f32.mrf.mxu0
        %v609 = vpop.f32.mrf.mxu0
        %610 = vdwg.mxu0
        %v611 = vpack.c.bf16 %v606, %v606
        %612 = vst.msk [vmem:[%s409] sm:$0xf] %vm481, %v611
        %s613 = sand.u32 %s192, 1
        %s614 = scalar_lea.sflag [#allocation4], %s613
        %s615 = sand.u32 %s192, 1
        %s616 = smul.addr %s615, 4
        %s617 = scalar_lea.vmem [#allocation10], %s616
        %s618 = sand.u32 %s32, 1
        %s619 = scalar_lea.sflag [#allocation12], %s618
        %s620 = sand.u32 %s218, 1
        %s621 = smul.addr %s620, 4
        %s622 = scalar_lea.vmem [#allocation11], %s621
        %s623 = sand.u32 %s32, 1
        %s624 = scalar_lea.sflag [#allocation12], %s623
        %s625 = sand.u32 %s244, 1
        %s626 = smul.addr %s625, 4
        %s627 = scalar_lea.vmem [#allocation13], %s626
        // Predicated region
        $region65: #{tpu_custom_call.1} parent=47 // pred_check
          %p628 = pneg %p202
        $region66: #{tpu_custom_call.1} parent=47 // pred_check_branch
          %630 = sbr.rel (%p628) target = $region68
        $region67: #{tpu_custom_call.1} parent=47 // pred_region
          %s632 = ssub.s32 64, 64
          %633 = vsyncadd %s614, %s632
          %s634 = smul.addr %s32, 64
          %s635 = scalar_lea.hbm %s7, %s634
          %s637 = sshll.u32 %s617, 4
          %s638 = int_to_ptr.vmem [resolvable:$true] %s637
          %640 = dma.vmem_to_hbm [thread:$0]  %s638, 64, %s635, %s614
        $region68: #{tpu_custom_call.1} parent=47 // pred_fallthru
          _
        // Predicated region
        $region69: #{tpu_custom_call.1} parent=47 // pred_check
          %p641 = pneg %p228
        $region70: #{tpu_custom_call.1} parent=47 // pred_check_branch
          %643 = sbr.rel (%p641) target = $region72
        $region71: #{tpu_custom_call.1} parent=47 // pred_region
          %s645 = ssub.s32 64, 64
          %646 = vsyncadd %s619, %s645
          %s647 = smul.addr %s32, 64
          %s648 = scalar_lea.hbm %s8, %s647
          %s650 = sshll.u32 %s622, 4
          %s651 = int_to_ptr.vmem [resolvable:$true] %s650
          %653 = dma.vmem_to_hbm [thread:$0]  %s651, 64, %s648, %s619
        $region72: #{tpu_custom_call.1} parent=47 // pred_fallthru
          _
        // Predicated region
        $region73: #{tpu_custom_call.1} parent=47 // pred_check
          %p654 = pneg %p254
        $region74: #{tpu_custom_call.1} parent=47 // pred_check_branch
          %656 = sbr.rel (%p654) target = $region76
        $region75: #{tpu_custom_call.1} parent=47 // pred_region
          %s658 = ssub.s32 64, 64
          %659 = vsyncadd %s624, %s658
          %s660 = smul.addr %s32, 64
          %s661 = scalar_lea.hbm %s9, %s660
          %s663 = sshll.u32 %s627, 4
          %s664 = int_to_ptr.vmem [resolvable:$true] %s663
          %666 = dma.vmem_to_hbm [thread:$0]  %s664, 64, %s661, %s624
        $region76: #{tpu_custom_call.1} parent=47 // pred_fallthru
          _
      $region48: #{tpu_custom_call.1} parent=5 // pred_fallthru
        _
      %p667 = scmp.le.s32.totalorder 2, %s27
      // Predicated region
      $region77: #{tpu_custom_call.1} parent=5 // pred_check
        %p668 = pneg %p667
      $region78: #{tpu_custom_call.1} parent=5 // pred_check_branch
        %670 = sbr.rel (%p668) target = $region80
      $region79: #{tpu_custom_call.1} parent=5 // pred_region
        %s671 = ssub.s32 %s27, 2
        // Predicated region
        $region81: #{tpu_custom_call.1} parent=79 // pred_check
          %p672 = pneg %p208
        $region82: #{tpu_custom_call.1} parent=79 // pred_check_branch
          %674 = sbr.rel (%p672) target = $region84
        $region83: #{tpu_custom_call.1} parent=79 // pred_region
          %s675 = sand.u32 %s193, 1
          %s676 = scalar_lea.sflag [#allocation4], %s675
          %s677 = sand.u32 %s193, 1
          %s678 = smul.addr %s677, 4
          %s679 = scalar_lea.vmem [#allocation10], %s678
          %680 = dma.done %s676, 64
        $region84: #{tpu_custom_call.1} parent=79 // pred_fallthru
          _
        // Predicated region
        $region85: #{tpu_custom_call.1} parent=79 // pred_check
          %p681 = pneg %p234
        $region86: #{tpu_custom_call.1} parent=79 // pred_check_branch
          %683 = sbr.rel (%p681) target = $region88
        $region87: #{tpu_custom_call.1} parent=79 // pred_region
          %s684 = sand.u32 %s33, 1
          %s685 = scalar_lea.sflag [#allocation12], %s684
          %s686 = sand.u32 %s219, 1
          %s687 = smul.addr %s686, 4
          %s688 = scalar_lea.vmem [#allocation11], %s687
          %689 = dma.done %s685, 64
        $region88: #{tpu_custom_call.1} parent=79 // pred_fallthru
          _
        // Predicated region
        $region89: #{tpu_custom_call.1} parent=79 // pred_check
          %p690 = pneg %p260
        $region90: #{tpu_custom_call.1} parent=79 // pred_check_branch
          %692 = sbr.rel (%p690) target = $region92
        $region91: #{tpu_custom_call.1} parent=79 // pred_region
          %s693 = sand.u32 %s33, 1
          %s694 = scalar_lea.sflag [#allocation12], %s693
          %s695 = sand.u32 %s245, 1
          %s696 = smul.addr %s695, 4
          %s697 = scalar_lea.vmem [#allocation13], %s696
          %698 = dma.done %s694, 64
        $region92: #{tpu_custom_call.1} parent=79 // pred_fallthru
          _
      $region80: #{tpu_custom_call.1} parent=5 // pred_fallthru
        _
    $region6: #{tpu_custom_call.1} parent=1 // loop_footer
      %s31 = sadd.s32 1, %s27
    $region7: #{tpu_custom_call.1} parent=1 // loop_footer_branch
      %26 = sbr.rel target = $region3
    $region8: #{tpu_custom_call.1} parent=1 // loop_exit
      _
    %699 = vsyncpa [#allocation3], 1
    %s700 = scalar_lea.sflag [#allocation3], 1
    %701 = vsyncpa %s700, 1
    %702 = vsyncpa [#allocation6], 1
    %703 = vsyncpa [#allocation9], 1
    %704 = vsyncpa [#allocation4], 1
    %s705 = scalar_lea.sflag [#allocation4], 1
    %706 = vsyncpa %s705, 1
    %707 = vsyncpa [#allocation12], 1
    %s708 = scalar_lea.sflag [#allocation12], 1
    %709 = vsyncpa %s708, 1

</llo_original>
